<compile_context>
chip_gen: v6e
topology: v6e:2x2x1
jax: 0.10.0
libtpu: 0.0.40
codegen_flags: <defaults>
</compile_context>

<pallas_src>
import jax
import jax.numpy as jnp
from jax import lax
from jax.experimental import pallas as pl
from jax.experimental.pallas import tpu as pltpu

LN_EPS = 1e-5  # torch.nn.LayerNorm default


# ----------------------------- kernels -----------------------------


def _layernorm_store(y, g_ref, beta_ref, o_ref):
    """One-pass LayerNorm epilogue in f32: var = E[y^2] - E[y]^2 (single XLU sweep)."""
    mean = jnp.mean(y, axis=-1, keepdims=True)
    mean_sq = jnp.mean(y * y, axis=-1, keepdims=True)
    var = jnp.maximum(mean_sq - mean * mean, 0.0)  # one-pass var can dip slightly < 0
    inv_std = lax.rsqrt(var + LN_EPS)
    o_ref[...] = (
        (y - mean) * inv_std * g_ref[...].astype(jnp.float32)
        + beta_ref[...].astype(jnp.float32)
    ).astype(o_ref.dtype)


def add_and_norm_resident_kernel(x_ref, wt_ref, b_ref, g_ref, beta_ref, o_ref):
    """Weight fully VMEM-resident; single grid axis over row tiles."""
    x = x_ref[...]                                  # (tile_r, D), native dtype on MXU
    # wt_ref holds W^T (in_dim, out_dim): plain contraction, no in-kernel transpose.
    fx = jnp.dot(x, wt_ref[...], preferred_element_type=jnp.float32)
    y = x.astype(jnp.float32) + fx + b_ref[...].astype(jnp.float32)
    _layernorm_store(y, g_ref, beta_ref, o_ref)


def add_and_norm_kchunk_kernel(xk_ref, xfull_ref, wt_ref, b_ref, g_ref, beta_ref,
                               o_ref, acc_ref):
    """Large-D path: W^T streamed as (tile_k, D) slabs along an 'arbitrary' K axis."""
    k = pl.program_id(1)

    @pl.when(k == 0)
    def _():
        acc_ref[...] = jnp.zeros_like(acc_ref)

    acc_ref[...] += jnp.dot(xk_ref[...], wt_ref[...],
                            preferred_element_type=jnp.float32)

    @pl.when(k == pl.num_programs(1) - 1)
    def _():
        # Residual add + bias in f32, then the fused LayerNorm epilogue.
        y = (xfull_ref[...].astype(jnp.float32) + acc_ref[...]
             + b_ref[...].astype(jnp.float32))
        _layernorm_store(y, g_ref, beta_ref, o_ref)


# ------------------------- sizing heuristics ------------------------


def _vmem_capacity_bytes() -> int:
    try:
        cap = int(pltpu.get_tpu_info().vmem_capacity_bytes)
        if cap > 0:
            return cap
    except Exception:
        pass
    return 64 << 20  # conservative default: v7x per-TensorCore VMEM


def _resident_vmem_bytes(tile_r, D, itemsize):
    return (2 * tile_r * D * itemsize        # x tile (double-buffered)
            + 2 * tile_r * D * itemsize      # out tile (double-buffered)
            + D * D * itemsize               # W^T, single-buffered (Buffered(1))
            + 3 * tile_r * D * 4             # fx / y / normed f32 intermediates
            + 4 * D * 4)                     # bias, gamma, beta (+ slack)


def _kchunk_vmem_bytes(tile_r, tile_k, D, itemsize):
    return (2 * tile_r * tile_k * itemsize   # x K-chunk (double-buffered)
            + tile_r * D * itemsize          # full x row tile (revisited across k)
            + 2 * tile_k * D * itemsize      # W^T slab (double-buffered)
            + 2 * tile_r * D * itemsize      # out tile (double-buffered)
            + tile_r * D * 4                 # f32 accumulator scratch
            + 2 * tile_r * D * 4             # f32 epilogue intermediates
            + 4 * D * 4)


def _pick_tiles(R, D, itemsize, budget, force_k_chunk=False, tile_k_override=None):
    sublane = {1: 32, 2: 16}.get(itemsize, 8)
    w_bytes = D * D * itemsize
    # Stream the weight once it no longer comfortably fits the VMEM budget (~40%).
    use_kchunk = (force_k_chunk or w_bytes > (2 * budget) // 5) and D % 128 == 0
    # TODO(synk): for large D with D % 128 != 0, pad D to a multiple of 128 with masked
    # LayerNorm statistics (lane-dense stores); such shapes currently use the resident path.

    if use_kchunk:
        if tile_k_override is not None and D % tile_k_override == 0:
            tile_k = tile_k_override
        else:
            tile_k = 128
            for cand in (512, 256):
                if D % cand == 0 and 2 * cand * D * itemsize <= budget // 4:
                    tile_k = cand
                    break
    else:
        tile_k = D

    def working(tr):
        return (_kchunk_vmem_bytes(tr, tile_k, D, itemsize) if use_kchunk
                else _resident_vmem_bytes(tr, D, itemsize))

    # tile_r capped at 256: matches the 256x256 MXU on v6e/v7x (128/256 both saturate
    # v5e's 128x128); larger only adds VMEM pressure with no MXU benefit.
    tile_r = None
    for t in (256, 128, 64, 32, 16, 8):
        if t <= R and t % sublane == 0 and working(t) <= budget:
            tile_r = t
            break
    if tile_r is None:
        tile_r = R if R < sublane else sublane  # tiny inputs: block == full array, legal
    return tile_r, tile_k, use_kchunk, working(tile_r)


# ----------------------------- wrapper ------------------------------


def add_and_norm(x, w, b, gamma, beta, *, use_bf16_matmul=False,
                 force_k_chunk=False, tile_k_override=None):
    """Fused LayerNorm(x + x @ W^T + b) * gamma + beta.

    x: (B, S, D); w: (D, D) torch-style Linear weight (out_dim, in_dim);
    b / gamma / beta: (D,).

    Matmul operands run in x's dtype (explicit choice: an f32 weight is downcast when x
    is bf16, i.e. standard mixed precision). use_bf16_matmul=True additionally routes
    f32 inputs through the bf16 MXU (faster, ~1e-3 accuracy); the residual add and the
    LayerNorm epilogue always run in f32.
    """
    B, S, D = x.shape
    R = B * S
    out_dtype = x.dtype

    mm_dtype = jnp.bfloat16 if (use_bf16_matmul and x.dtype == jnp.float32) else x.dtype
    itemsize = jnp.dtype(mm_dtype).itemsize

    x2 = x.reshape(R, D).astype(mm_dtype)
    # Pre-transpose ONCE on the host -> (in_dim, out_dim); essentially free in XLA and
    # avoids any per-grid-step XLU transpose of the (D, D) weight inside the kernel.
    wt = jnp.transpose(w).astype(mm_dtype)
    b2 = b.reshape(1, D).astype(jnp.float32)       # epilogue params stay f32
    g2 = gamma.reshape(1, D).astype(jnp.float32)
    be2 = beta.reshape(1, D).astype(jnp.float32)

    cap = _vmem_capacity_bytes()
    budget = int(cap * 0.6)
    tile_r, tile_k, use_kchunk, working = _pick_tiles(
        R, D, itemsize, budget, force_k_chunk, tile_k_override)

    num_row_tiles = pl.cdiv(R, tile_r)
    # Generation-aware scoped-VMEM request: working set (incl. f32 intermediates) with
    # headroom, floored at 32 MiB and capped below the physical per-core capacity.
    vmem_limit = int(min(int(cap * 0.9),
                         max(int(working * 1.25) + (4 << 20), 32 << 20)))

    const = dict(pipeline_mode=pl.Buffered(1))  # grid-invariant operands: single-buffer

    if not use_kchunk:
        grid = (num_row_tiles,)
        kernel = add_and_norm_resident_kernel
        in_specs = [
            pl.BlockSpec((tile_r, D), lambda i: (i, 0)),          # row tiles, pipelined
            pl.BlockSpec((D, D), lambda i: (0, 0), **const),      # resident W^T
            pl.BlockSpec((1, D), lambda i: (0, 0), **const),
            pl.BlockSpec((1, D), lambda i: (0, 0), **const),
            pl.BlockSpec((1, D), lambda i: (0, 0), **const),
        ]
        out_specs = pl.BlockSpec((tile_r, D), lambda i: (i, 0))
        scratch_shapes = []
        dim_sem = ("parallel",)
        operands = (x2, wt, b2, g2, be2)
        w_traffic = D * D * itemsize                              # weight fetched once
    else:
        num_k = D // tile_k
        grid = (num_row_tiles, num_k)
        kernel = add_and_norm_kchunk_kernel
        in_specs = [
            pl.BlockSpec((tile_r, tile_k), lambda i, k: (i, k)),  # x K-chunks (MXU lhs)
            pl.BlockSpec((tile_r, D), lambda i, k: (i, 0)),       # full rows (residual)
            pl.BlockSpec((tile_k, D), lambda i, k: (k, 0)),       # streamed W^T slabs
            pl.BlockSpec((1, D), lambda i, k: (0, 0), **const),
            pl.BlockSpec((1, D), lambda i, k: (0, 0), **const),
            pl.BlockSpec((1, D), lambda i, k: (0, 0), **const),
        ]
        out_specs = pl.BlockSpec((tile_r, D), lambda i, k: (i, 0))
        scratch_shapes = [pltpu.VMEM((tile_r, D), jnp.float32)]
        dim_sem = ("parallel", "arbitrary")
        operands = (x2, x2, wt, b2, g2, be2)
        w_traffic = num_row_tiles * D * D * itemsize              # re-streamed per row tile

    # Note: when R % tile_r != 0 the last row tile contains padded rows; LayerNorm is
    # strictly per-row, so those rows are garbage-in/garbage-out and masked on writeback.
    cost = pl.CostEstimate(
        flops=2 * R * D * D + 10 * R * D,
        transcendentals=R,  # one rsqrt per row
        bytes_accessed=(R * D * itemsize * (2 if use_kchunk else 1)
                        + w_traffic
                        + R * D * jnp.dtype(out_dtype).itemsize
                        + 3 * D * 4),
    )

    out = pl.pallas_call(
        kernel,
        out_shape=jax.ShapeDtypeStruct((R, D), out_dtype),
        grid=grid,
        in_specs=in_specs,
        out_specs=out_specs,
        scratch_shapes=scratch_shapes,
        compiler_params=pltpu.CompilerParams(
            dimension_semantics=dim_sem,        # row tiles independent -> megacore shard
            vmem_limit_bytes=vmem_limit,
        ),
        cost_estimate=cost,
    )(*operands)
    return out.reshape(B, S, D)


# ----------------------------- reference ----------------------------


def add_and_norm_ref(x, w, b, gamma, beta):
    """Pure-JAX reference matching PyTorch AddAndNorm(Linear) semantics."""
    fx = jnp.einsum("bsd,ed->bse", x, w) + b   # Linear: x @ W^T + b
    y = x + fx
    mean = jnp.mean(y, axis=-1, keepdims=True)
    var = jnp.mean((y - mean) ** 2, axis=-1, keepdims=True)
    return (y - mean) * lax.rsqrt(var + LN_EPS) * gamma + beta


if __name__ == "__main__":
    # --- Primary check: small shapes implied by the module (resident-weight path) ---
    batch, seq, embed_dim = 2, 8, 32
    key = jax.random.PRNGKey(0)
    kx, kw, kb = jax.random.split(key, 3)

    x = jax.random.normal(kx, (batch, seq, embed_dim), dtype=jnp.float32)
    bound = 1.0 / (embed_dim ** 0.5)
    w = jax.random.uniform(kw, (embed_dim, embed_dim), jnp.float32, -bound, bound)
    b = jax.random.uniform(kb, (embed_dim,), jnp.float32, -bound, bound)
    gamma = jnp.ones((embed_dim,), jnp.float32)   # nn.LayerNorm default init
    beta = jnp.zeros((embed_dim,), jnp.float32)

    out = jax.block_until_ready(add_and_norm(x, w, b, gamma, beta))
    ref = add_and_norm_ref(x, w, b, gamma, beta)
    assert out.shape == (batch, seq, embed_dim)
    assert jnp.allclose(out, ref, atol=1e-4, rtol=1e-4), "mismatch vs reference (resident path)"

    # --- Secondary check: exercise the K-chunked (streamed-weight / large-D, v7x) path
    #     at a still-small shape (D=256 -> two 128-wide K chunks). ---
    d_big = 256
    kx2, kw2, kb2 = jax.random.split(jax.random.PRNGKey(1), 3)
    bound2 = 1.0 / (d_big ** 0.5)
    x_b = jax.random.normal(kx2, (batch, seq, d_big), dtype=jnp.float32)
    w_b = jax.random.uniform(kw2, (d_big, d_big), jnp.float32, -bound2, bound2)
    b_b = jax.random.uniform(kb2, (d_big,), jnp.float32, -bound2, bound2)
    g_b = jnp.ones((d_big,), jnp.float32)
    be_b = jnp.zeros((d_big,), jnp.float32)

    out_b = jax.block_until_ready(
        add_and_norm(x_b, w_b, b_b, g_b, be_b, force_k_chunk=True, tile_k_override=128))
    ref_b = add_and_norm_ref(x_b, w_b, b_b, g_b, be_b)
    assert jnp.allclose(out_b, ref_b, atol=2e-4, rtol=2e-4), "mismatch vs reference (k-chunk path)"

    print("KERNEL_OK")
</pallas_src>

<mosaic_0001>
module attributes {stable_mosaic.version = 11 : i64} {
  func.func @add_and_norm_resident_kernel(%arg0: i32, %arg1: memref<16x32xf32, #tpu.memory_space<vmem>>, %arg2: memref<32x32xf32, #tpu.memory_space<vmem>>, %arg3: memref<1x32xf32, #tpu.memory_space<vmem>>, %arg4: memref<1x32xf32, #tpu.memory_space<vmem>>, %arg5: memref<1x32xf32, #tpu.memory_space<vmem>>, %arg6: memref<16x32xf32, #tpu.memory_space<vmem>>) attributes {dimension_semantics = [#tpu.dimension_semantics<parallel>], iteration_bounds = array<i64: 1>, scalar_prefetch = 0 : i64, scratch_operands = 0 : i64, tpu.core_type = #tpu.core_type<tc>, window_params = [{transform_indices = @transform_0, window_bounds = array<i64: 16, 32>}, {pipeline_mode = #tpu.pipeline_mode<synchronous>, transform_indices = @transform_1, window_bounds = array<i64: 32, 32>}, {pipeline_mode = #tpu.pipeline_mode<synchronous>, transform_indices = @transform_2, window_bounds = array<i64: 1, 32>}, {pipeline_mode = #tpu.pipeline_mode<synchronous>, transform_indices = @transform_3, window_bounds = array<i64: 1, 32>}, {pipeline_mode = #tpu.pipeline_mode<synchronous>, transform_indices = @transform_4, window_bounds = array<i64: 1, 32>}, {transform_indices = @transform_5, window_bounds = array<i64: 16, 32>}]} {
    %c0 = arith.constant 0 : index
    %c0_0 = arith.constant 0 : index
    %0 = vector.load %arg1[%c0, %c0_0] : memref<16x32xf32, #tpu.memory_space<vmem>>, vector<16x32xf32>
    %c0_1 = arith.constant 0 : index
    %c0_2 = arith.constant 0 : index
    %1 = vector.load %arg2[%c0_1, %c0_2] : memref<32x32xf32, #tpu.memory_space<vmem>>, vector<32x32xf32>
    %cst = arith.constant dense<0.000000e+00> : vector<16x32xf32>
    %2 = tpu.matmul %0, %1, %cst {dimension_numbers = #tpu.dot_dimension_numbers<[1], [0], [0], [1], [0, 0, 1, 1], [], []>} : vector<16x32xf32>, vector<32x32xf32>, vector<16x32xf32> -> vector<16x32xf32>
    %3 = arith.addf %0, %2 : vector<16x32xf32>
    %c0_3 = arith.constant 0 : index
    %c0_4 = arith.constant 0 : index
    %4 = vector.load %arg3[%c0_3, %c0_4] : memref<1x32xf32, #tpu.memory_space<vmem>>, vector<1x32xf32>
    %5 = vector.broadcast %4 : vector<1x32xf32> to vector<16x32xf32>
    %6 = arith.addf %3, %5 : vector<16x32xf32>
    %cst_5 = arith.constant dense<0.000000e+00> : vector<16xf32>
    %7 = vector.multi_reduction <add>, %6, %cst_5 [1] : vector<16x32xf32> to vector<16xf32>
    %8 = vector.shape_cast %7 : vector<16xf32> to vector<16x1xf32>
    %cst_6 = arith.constant 3.200000e+01 : f32
    %9 = vector.broadcast %cst_6 : f32 to vector<16x1xf32>
    %10 = arith.divf %8, %9 : vector<16x1xf32>
    %11 = arith.mulf %6, %6 : vector<16x32xf32>
    %cst_7 = arith.constant dense<0.000000e+00> : vector<16xf32>
    %12 = vector.multi_reduction <add>, %11, %cst_7 [1] : vector<16x32xf32> to vector<16xf32>
    %13 = vector.shape_cast %12 : vector<16xf32> to vector<16x1xf32>
    %cst_8 = arith.constant 3.200000e+01 : f32
    %14 = vector.broadcast %cst_8 : f32 to vector<16x1xf32>
    %15 = arith.divf %13, %14 : vector<16x1xf32>
    %16 = arith.mulf %10, %10 : vector<16x1xf32>
    %17 = arith.subf %15, %16 : vector<16x1xf32>
    %cst_9 = arith.constant 0.000000e+00 : f32
    %18 = vector.broadcast %cst_9 : f32 to vector<16x1xf32>
    %19 = arith.maximumf %17, %18 : vector<16x1xf32>
    %cst_10 = arith.constant 9.99999974E-6 : f32
    %20 = vector.broadcast %cst_10 : f32 to vector<16x1xf32>
    %21 = arith.addf %19, %20 : vector<16x1xf32>
    %22 = math.rsqrt %21 : vector<16x1xf32>
    %23 = vector.broadcast %10 : vector<16x1xf32> to vector<16x32xf32>
    %24 = arith.subf %6, %23 : vector<16x32xf32>
    %25 = vector.broadcast %22 : vector<16x1xf32> to vector<16x32xf32>
    %26 = arith.mulf %24, %25 : vector<16x32xf32>
    %c0_11 = arith.constant 0 : index
    %c0_12 = arith.constant 0 : index
    %27 = vector.load %arg4[%c0_11, %c0_12] : memref<1x32xf32, #tpu.memory_space<vmem>>, vector<1x32xf32>
    %28 = vector.broadcast %27 : vector<1x32xf32> to vector<16x32xf32>
    %29 = arith.mulf %26, %28 : vector<16x32xf32>
    %c0_13 = arith.constant 0 : index
    %c0_14 = arith.constant 0 : index
    %30 = vector.load %arg5[%c0_13, %c0_14] : memref<1x32xf32, #tpu.memory_space<vmem>>, vector<1x32xf32>
    %31 = vector.broadcast %30 : vector<1x32xf32> to vector<16x32xf32>
    %32 = arith.addf %29, %31 : vector<16x32xf32>
    %c0_15 = arith.constant 0 : index
    %c0_16 = arith.constant 0 : index
    %33 = vector.load %arg6[%c0_15, %c0_16] : memref<16x32xf32, #tpu.memory_space<vmem>>, vector<16x32xf32>
    tpu.vector_store %arg6[%c0_15, %c0_16], %32 {strides = array<i32>} : memref<16x32xf32, #tpu.memory_space<vmem>>, vector<16x32xf32>,
    return
  }
  func.func @transform_0(%arg0: i32) -> (i32, i32) {
    %c0_i32 = arith.constant 0 : i32
    %c0_i32_0 = arith.constant 0 : i32
    return %arg0, %c0_i32 : i32, i32
  }
  func.func @transform_1(%arg0: i32) -> (i32, i32) {
    %c0_i32 = arith.constant 0 : i32
    %c0_i32_0 = arith.constant 0 : i32
    %c0_i32_1 = arith.constant 0 : i32
    return %c0_i32, %c0_i32_0 : i32, i32
  }
  func.func @transform_2(%arg0: i32) -> (i32, i32) {
    %c0_i32 = arith.constant 0 : i32
    %c0_i32_0 = arith.constant 0 : i32
    %c0_i32_1 = arith.constant 0 : i32
    return %c0_i32, %c0_i32_0 : i32, i32
  }
  func.func @transform_3(%arg0: i32) -> (i32, i32) {
    %c0_i32 = arith.constant 0 : i32
    %c0_i32_0 = arith.constant 0 : i32
    %c0_i32_1 = arith.constant 0 : i32
    return %c0_i32, %c0_i32_0 : i32, i32
  }
  func.func @transform_4(%arg0: i32) -> (i32, i32) {
    %c0_i32 = arith.constant 0 : i32
    %c0_i32_0 = arith.constant 0 : i32
    %c0_i32_1 = arith.constant 0 : i32
    return %c0_i32, %c0_i32_0 : i32, i32
  }
  func.func @transform_5(%arg0: i32) -> (i32, i32) {
    %c0_i32 = arith.constant 0 : i32
    %c0_i32_0 = arith.constant 0 : i32
    return %arg0, %c0_i32 : i32, i32
  }
}

</mosaic_0001>

<llo_original>
// kernel: tpu_custom_call.1
$region0: #{tpu_custom_call.1}
  #allocation0 [shape = 'u32[]', space=smem, size = 0x4, offset = 0x4, fixed_abs, tag = 'smem constant byte address 0x4 - core index']
  #allocation1 [shape = 'u32[144,128]{1,0:T(1,128)}', space=vmem, size = 0x12000, scoped, tag = 'internal scratch']
  %s0 = inlined_call_operand.hbm [shape: f32[16,32], index: 0, kind: input, shape index: {}]
  %s1 = inlined_call_operand.hbm [shape: f32[32,32], index: 1, kind: input, shape index: {}]
  %s2 = inlined_call_operand.vmem [shape: f32[1,32], index: 2, kind: input, shape index: {}]
  %s3 = inlined_call_operand.vmem [shape: f32[1,32], index: 3, kind: input, shape index: {}]
  %s4 = inlined_call_operand.vmem [shape: f32[1,32], index: 4, kind: input, shape index: {}]
  %s5 = inlined_call_operand.hbm [shape: f32[16,32], index: 5, kind: output, shape index: {}]
  %s6 = sld [smem:[#allocation0]]
  $region38: #{tpu_custom_call.1} parent=0
    _
  %s8 = ssub.s32 1, %s6
  %s9 = scalar_select 0, %s8, %s6
  $region1: #{tpu_custom_call.1} parent=0
    #allocation2 [shape = 'u8[8192]{0}', space=vmem, size = 0x2000, scoped, tag = 'input window, operand 0, single buffered']
    #allocation3 [shape = 's32[1]{0}', space=sflag, size = 0x4, scoped, tag = 'scoped memory for tpu_custom_call.1']
    #allocation4 [shape = 's32[1]{0}', space=sflag, size = 0x4, scoped, tag = 'scoped memory for tpu_custom_call.1']
    #allocation5 [shape = 'u8[16384]{0}', space=vmem, size = 0x4000, scoped, tag = 'input window, operand 1, single buffered']
    #allocation6 [shape = 's32[1]{0}', space=sflag, size = 0x4, scoped, tag = 'scoped memory for tpu_custom_call.1']
    #allocation7 [shape = 'u8[8192]{0}', space=vmem, size = 0x2000, scoped, tag = 'output window, operand 0, single buffered']
    %10 = vsyncpa [#allocation3], 0
    %11 = vsyncpa [#allocation6], 0
    %12 = vsyncpa [#allocation4], 0
    // Predicated region
    $region2: #{tpu_custom_call.1} parent=1 // pred_check
      _
    $region3: #{tpu_custom_call.1} parent=1 // pred_check_branch
      %14 = sbr.rel (0) target = $region5
    $region4: #{tpu_custom_call.1} parent=1 // pred_region
      %s16 = ssub.s32 256, 256
      %17 = vsyncadd [#allocation3], %s16
      %s18 = sshll.u32 [#allocation2], 4
      %s19 = int_to_ptr.vmem [resolvable:$true] %s18
      %24 = dma.hbm_to_vmem [thread:$0]  %s0, 256, %s19, [#allocation3], 128, 128, 8
    $region5: #{tpu_custom_call.1} parent=1 // pred_fallthru
      _
    // Predicated region
    $region6: #{tpu_custom_call.1} parent=1 // pred_check
      _
    $region7: #{tpu_custom_call.1} parent=1 // pred_check_branch
      %26 = sbr.rel (0) target = $region9
    $region8: #{tpu_custom_call.1} parent=1 // pred_region
      %s28 = ssub.s32 512, 512
      %29 = vsyncadd [#allocation6], %s28
      %s30 = sshll.u32 [#allocation5], 4
      %s31 = int_to_ptr.vmem [resolvable:$true] %s30
      %36 = dma.hbm_to_vmem [thread:$0]  %s1, 512, %s31, [#allocation6], 128, 128, 8
    $region9: #{tpu_custom_call.1} parent=1 // pred_fallthru
      _
    // Predicated region
    $region10: #{tpu_custom_call.1} parent=1 // pred_check
      _
    $region11: #{tpu_custom_call.1} parent=1 // pred_check_branch
      %38 = sbr.rel (0) target = $region13
    $region12: #{tpu_custom_call.1} parent=1 // pred_region
      _
    $region13: #{tpu_custom_call.1} parent=1 // pred_fallthru
      _
    // Predicated region
    $region14: #{tpu_custom_call.1} parent=1 // pred_check
      _
    $region15: #{tpu_custom_call.1} parent=1 // pred_check_branch
      %40 = sbr.rel (0) target = $region17
    $region16: #{tpu_custom_call.1} parent=1 // pred_region
      _
    $region17: #{tpu_custom_call.1} parent=1 // pred_fallthru
      _
    // Predicated region
    $region18: #{tpu_custom_call.1} parent=1 // pred_check
      _
    $region19: #{tpu_custom_call.1} parent=1 // pred_check_branch
      %42 = sbr.rel (0) target = $region21
    $region20: #{tpu_custom_call.1} parent=1 // pred_region
      _
    $region21: #{tpu_custom_call.1} parent=1 // pred_fallthru
      _
    // Predicated region
    $region22: #{tpu_custom_call.1} parent=1 // pred_check
      _
    $region23: #{tpu_custom_call.1} parent=1 // pred_check_branch
      %44 = sbr.rel (0) target = $region25
    $region24: #{tpu_custom_call.1} parent=1 // pred_region
      %45 = dma.done [#allocation3], 256
    $region25: #{tpu_custom_call.1} parent=1 // pred_fallthru
      _
    // Predicated region
    $region26: #{tpu_custom_call.1} parent=1 // pred_check
      _
    $region27: #{tpu_custom_call.1} parent=1 // pred_check_branch
      %47 = sbr.rel (0) target = $region29
    $region28: #{tpu_custom_call.1} parent=1 // pred_region
      %48 = dma.done [#allocation6], 512
    $region29: #{tpu_custom_call.1} parent=1 // pred_fallthru
      _
    %v49 = vld [vmem:[#allocation2] sm:$0xff]
    %v50 = vld [vmem:[#allocation2 + $0x8] sm:$0xff]
    %v51 = vld [vmem:[#allocation5] sm:$0xff]
    %v52 = vld [vmem:[#allocation5 + $0x8] sm:$0xff]
    %v53 = vld [vmem:[#allocation5 + $0x10] sm:$0xff]
    %v54 = vld [vmem:[#allocation5 + $0x18] sm:$0xff]
    %vm55 = vcmask 261120
    %v57 = vsel %vm55, %v49, 0
    %v60 = vsel %vm55, %v50, 0
    %62 = vmatprep.subr.mxu0 0.0
    %63 = vmatpush1.msra.mxu0 0.0
    %64 = vmatprep.subr.mxu0 0.0
    %65 = vmatpush1.msra.mxu0 0.0
    %66 = vmatprep.subr.mxu0 0.0
    %67 = vmatpush1.msra.mxu0 0.0
    %68 = vmatprep.subr.mxu0 0.0
    %69 = vmatpush1.msra.mxu0 0.0
    %70 = vmatprep.subr.mxu0 0.0
    %71 = vmatpush1.msra.mxu0 0.0
    %72 = vmatprep.subr.mxu0 0.0
    %73 = vmatpush1.msra.mxu0 0.0
    %74 = vmatprep.subr.mxu0 0.0
    %75 = vmatpush1.msra.mxu0 0.0
    %76 = vmatprep.subr.mxu0 0.0
    %77 = vmatpush1.msra.mxu0 0.0
    %78 = vmatprep.subr.mxu0 0.0
    %79 = vmatpush1.msra.mxu0 0.0
    %80 = vmatprep.subr.mxu0 0.0
    %81 = vmatpush1.msra.mxu0 0.0
    %82 = vmatprep.subr.mxu0 0.0
    %83 = vmatpush1.msra.mxu0 0.0
    %84 = vmatprep.subr.mxu0 0.0
    %85 = vmatpush1.msra.mxu0 0.0
    %86 = vmatprep.subr.mxu0 0.0
    %87 = vmatpush1.msra.mxu0 %v54
    %88 = vmatprep.subr.mxu0 0.0
    %89 = vmatpush1.msra.mxu0 %v53
    %90 = vmatprep.subr.mxu0 0.0
    %91 = vmatpush1.msra.mxu0 %v52
    %92 = vmatprep.subr.mxu0 0.0
    %93 = vmatpush1.msra.mxu0 %v51
    %94 = vmatprep.subr.mxu0 0.0
    %95 = vmatpush2.msra.mxu0 0.0
    %96 = vmatprep.subr.mxu0 0.0
    %97 = vmatpush2.msra.mxu0 0.0
    %98 = vmatprep.subr.mxu0 0.0
    %99 = vmatpush2.msra.mxu0 0.0
    %100 = vmatprep.subr.mxu0 0.0
    %101 = vmatpush2.msra.mxu0 0.0
    %102 = vmatprep.subr.mxu0 0.0
    %103 = vmatpush2.msra.mxu0 0.0
    %104 = vmatprep.subr.mxu0 0.0
    %105 = vmatpush2.msra.mxu0 0.0
    %106 = vmatprep.subr.mxu0 0.0
    %107 = vmatpush2.msra.mxu0 0.0
    %108 = vmatprep.subr.mxu0 0.0
    %109 = vmatpush2.msra.mxu0 0.0
    %110 = vmatprep.subr.mxu0 0.0
    %111 = vmatpush2.msra.mxu0 0.0
    %112 = vmatprep.subr.mxu0 0.0
    %113 = vmatpush2.msra.mxu0 0.0
    %114 = vmatprep.subr.mxu0 0.0
    %115 = vmatpush2.msra.mxu0 0.0
    %116 = vmatprep.subr.mxu0 0.0
    %117 = vmatpush2.msra.mxu0 0.0
    %118 = vmatprep.subr.mxu0 0.0
    %119 = vmatpush2.msra.mxu0 0.0
    %120 = vmatprep.subr.mxu0 0.0
    %121 = vmatpush2.msra.mxu0 0.0
    %122 = vmatprep.subr.mxu0 0.0
    %123 = vmatpush2.msra.mxu0 0.0
    %124 = vmatprep.subr.mxu0 0.0
    %125 = vmatpush2.msra.mxu0 0.0
    %126 = vmatprep.mubr.f32.mxu0 0.0
    %127 = vmatmul.mubr.f32.gmra.mxu0 %v57
    %v128 = vpop.f32.mrf.mxu0
    %v129 = vadd.f32 0.0, %v128
    %v130 = vpop.f32.mrf.mxu0
    %131 = vmatprep.mubr.f32.mxu0 0.0
    %132 = vmatmul.mubr.f32.gmra.mxu0 %v60
    %v133 = vpop.f32.mrf.mxu0
    %v134 = vadd.f32 0.0, %v133
    %v135 = vpop.f32.mrf.mxu0
    %136 = vdwg.mxu0
    %v137 = vadd.f32 %v49, %v129
    %v138 = vadd.f32 %v50, %v134
    %v139 = vld [vmem:[%s2] sm:$0x1]
    %v141 = vlaneseq
    %v142 = vshrl.u32 %v141, 7
    %v143 = vsub.s32 0, %v142
    %v144 = vrot.slane %v139, %v143
    %v146 = vadd.f32 %v137, %v144
    %v147 = vadd.f32 %v138, %v144
    %v148 = vsel %vm55, %v146, 0.0
    %149 = vadd.xlane.f32.xlu0 %v148
    %v150 = vpop.xlane.xlu0 %149
    %v151 = vsel %vm55, %v147, 0.0
    %152 = vadd.xlane.f32.xlu0 %v151
    %v153 = vpop.xlane.xlu0 %152
    %v154 = vrcp.pop 32.0
    %v155 = vmul.f32 %v150, %v154
    %v156 = vmul.f32 %v153, %v154
    %v157 = vmul.f32 %v146, %v146
    %v158 = vmul.f32 %v147, %v147
    %v159 = vsel %vm55, %v157, 0.0
    %160 = vadd.xlane.f32.xlu0 %v159
    %v161 = vpop.xlane.xlu0 %160
    %v162 = vsel %vm55, %v158, 0.0
    %163 = vadd.xlane.f32.xlu0 %v162
    %v164 = vpop.xlane.xlu0 %163
    %v165 = vmul.f32 %v161, %v154
    %v166 = vmul.f32 %v164, %v154
    %v167 = vmul.f32 %v155, %v155
    %v168 = vmul.f32 %v156, %v156
    %v169 = vsub.f32 %v165, %v167
    %v170 = vsub.f32 %v166, %v168
    %v171 = vmax.f32 %v169, 0.0
    %v172 = vmax.f32 %v170, 0.0
    %v173 = vadd.f32 %v171, 1e-05
    %v174 = vadd.f32 %v172, 1e-05
    %v175 = vrsqrt.pop %v173
    %v176 = vrsqrt.pop %v174
    %v177 = vsub.f32 %v146, %v155
    %v178 = vsub.f32 %v147, %v156
    %v179 = vmul.f32 %v177, %v175
    %v180 = vmul.f32 %v178, %v176
    %v181 = vld [vmem:[%s3] sm:$0x1]
    %v183 = vlaneseq
    %v184 = vshrl.u32 %v183, 7
    %v185 = vsub.s32 0, %v184
    %v186 = vrot.slane %v181, %v185
    %v188 = vmul.f32 %v179, %v186
    %v189 = vmul.f32 %v180, %v186
    %v190 = vld [vmem:[%s4] sm:$0x1]
    %v192 = vlaneseq
    %v193 = vshrl.u32 %v192, 7
    %v194 = vsub.s32 0, %v193
    %v195 = vrot.slane %v190, %v194
    %v197 = vadd.f32 %v188, %v195
    %v198 = vadd.f32 %v189, %v195
    %199 = vst.msk [vmem:[#allocation7] sm:$0xff] %vm55, %v197
    %200 = vst.msk [vmem:[#allocation7 + $0x8] sm:$0xff] %vm55, %v198
    // Predicated region
    $region30: #{tpu_custom_call.1} parent=1 // pred_check
      _
    $region31: #{tpu_custom_call.1} parent=1 // pred_check_branch
      %202 = sbr.rel (0) target = $region33
    $region32: #{tpu_custom_call.1} parent=1 // pred_region
      %s204 = ssub.s32 256, 256
      %205 = vsyncadd [#allocation4], %s204
      %s206 = sshll.u32 [#allocation7], 4
      %s207 = int_to_ptr.vmem [resolvable:$true] %s206
      %212 = dma.vmem_to_hbm [thread:$0]  %s207, 256, %s5, [#allocation4], 128, 128, 8
    $region33: #{tpu_custom_call.1} parent=1 // pred_fallthru
      _
    // Predicated region
    $region34: #{tpu_custom_call.1} parent=1 // pred_check
      _
    $region35: #{tpu_custom_call.1} parent=1 // pred_check_branch
      %214 = sbr.rel (0) target = $region37
    $region36: #{tpu_custom_call.1} parent=1 // pred_region
      %215 = dma.done [#allocation4], 256
    $region37: #{tpu_custom_call.1} parent=1 // pred_fallthru
      _
    %216 = vsyncpa [#allocation3], 1
    %217 = vsyncpa [#allocation6], 1
    %218 = vsyncpa [#allocation4], 1

</llo_original>
